<compile_context>
chip_gen: v5e
topology: v5e:2x2
jax: 0.10.0
libtpu: 0.0.40
codegen_flags: <defaults>
</compile_context>

<pallas_src>
import functools

import jax
import jax.numpy as jnp
import numpy as np
from jax import lax
from jax.experimental import pallas as pl
from jax.experimental.pallas import tpu as pltpu


def _bert_embeddings_kernel(
    ids_sm,       # (N_rows,) int32  SMEM  flattened word ids (scalar prefetch)
    tt_ref,       # (TM, 1)   int32  VMEM  token-type ids for this row tile
    word_hbm,     # (V, H)           HBM   word embedding table (pl.ANY)
    pos_ref,      # (TM, H)   f32    VMEM  position table tiled to TM rows
    type_ref,     # (T, H)    f32    VMEM  token-type table
    gamma_ref,    # (1, H)    f32    VMEM  LayerNorm weight
    beta_ref,     # (1, H)    f32    VMEM  LayerNorm bias
    emb_ref,      # (TM, H)   out    LayerNorm(word + type + pos)
    inp_ref,      # (TM, H)   out    inputs_embeds (raw word gather)
    gbuf,         # (TM, H)   VMEM scratch: gather landing buffer
    sem,          # (NBUF,)   DMA semaphores
    *,
    tm,
    nbuf,
    eps,
):
    base = pl.program_id(0) * tm   # first flat-token row handled by this tile

    # ---- Word-embedding gather: NBUF-deep pipelined per-row HBM->VMEM DMAs ----
    def issue(row_in_tile):
        row = ids_sm[base + row_in_tile]
        pltpu.make_async_copy(
            word_hbm.at[row], gbuf.at[row_in_tile], sem.at[row_in_tile % nbuf]
        ).start()

    for j in range(nbuf):          # prime the pipeline (static unroll, nbuf small)
        issue(j)

    @pl.loop(0, tm)
    def _(i):
        # Wait for row i's DMA (descriptor only needs matching shapes + sem).
        pltpu.make_async_copy(
            word_hbm.at[0], gbuf.at[i], sem.at[i % nbuf]
        ).wait()

        @pl.when(i + nbuf < tm)
        def _():
            issue(i + nbuf)

    inputs_embeds = gbuf[...].astype(jnp.float32)              # (TM, H)

    # ---- Token-type embedding: VPU selects over a tiny table (no MXU) --------
    tts = tt_ref[...]                                           # (TM, 1) int32
    type_emb = type_ref[0:1, :].astype(jnp.float32)             # row 0 default
    for k in range(1, type_ref.shape[0]):                       # T is tiny (2)
        type_emb = jnp.where(
            tts == k, type_ref[k:k + 1, :].astype(jnp.float32), type_emb
        )

    # Default position_ids = arange(S) repeated per sequence; pos_ref is the
    # (S, H) table pre-tiled to (TM, H) so it adds directly.
    emb = inputs_embeds + type_emb + pos_ref[...].astype(jnp.float32)

    # ---- LayerNorm over hidden (rsqrt -> EUP; avoids sqrt + divide) ----------
    mean = jnp.mean(emb, axis=-1, keepdims=True)
    centered = emb - mean
    var = jnp.mean(centered * centered, axis=-1, keepdims=True)
    inv = lax.rsqrt(var + eps)
    normed = centered * inv * gamma_ref[...] + beta_ref[...]

    # Dropout (eval mode) is the identity.
    emb_ref[...] = normed.astype(emb_ref.dtype)
    inp_ref[...] = inputs_embeds.astype(inp_ref.dtype)


def _choose_row_tile(n_rows, s, target=512):
    """Largest tile of whole sequences (multiple of s, 8-row aligned, divides
    n_rows, <= target).  Keeps >= 2 grid steps when there is enough work so
    dimension_semantics=("parallel",) can still shard across v7x's 2 TCs."""
    best = None
    for m in range(1, n_rows // s + 1):
        tm = m * s
        if n_rows % tm:
            continue
        if tm % 8 and tm != n_rows:
            continue
        if tm > target:
            break
        best = tm
    if best is None:
        best = n_rows
    if n_rows // best < 2:
        for m in range(best // s, 0, -1):
            tm = m * s
            if (n_rows % tm == 0 and (tm % 8 == 0 or tm == n_rows)
                    and n_rows // tm >= 2):
                best = tm
                break
    return best


def bert_embeddings(
    input_ids,          # (B, C, S) int
    token_type_ids,     # (B, C, S) int
    word_table,         # (V, H)
    pos_table,          # (P, H), P must equal S for the default-ids path
    type_table,         # (T, H)
    ln_weight,          # (H,)
    ln_bias,            # (H,)
    *,
    eps=1e-12,
    out_dtype=None,         # e.g. jnp.bfloat16 to halve HBM writeback
    row_tile_target=512,    # rows of tokens per grid step
    gather_depth=8,         # in-flight word-row DMAs
):
    b, c, s = input_ids.shape
    v, h = word_table.shape
    if pos_table.shape[0] != s:
        # The module's default position_ids construction (arange(max_pos)
        # .expand(B, C, S)) only type-checks when max_position_embeddings == S.
        raise ValueError("max_position_embeddings must equal seq_length "
                         "for the default position_ids path")

    n_rows = b * c * s
    tm = _choose_row_tile(n_rows, s, row_tile_target)
    grid = n_rows // tm
    nbuf = min(gather_depth, tm)
    out_dtype = word_table.dtype if out_dtype is None else out_dtype

    ids_flat = input_ids.reshape(n_rows).astype(jnp.int32)        # SMEM prefetch
    tt_col = token_type_ids.reshape(n_rows, 1).astype(jnp.int32)
    pos_tile = jnp.tile(pos_table.astype(jnp.float32), (tm // s, 1))  # (TM, H)
    type_f = type_table.astype(jnp.float32)
    gamma = ln_weight.reshape(1, h).astype(jnp.float32)
    beta = ln_bias.reshape(1, h).astype(jnp.float32)

    kernel = functools.partial(_bert_embeddings_kernel, tm=tm, nbuf=nbuf, eps=eps)

    emb_flat, inp_flat = pl.pallas_call(
        kernel,
        out_shape=(
            jax.ShapeDtypeStruct((n_rows, h), out_dtype),
            jax.ShapeDtypeStruct((n_rows, h), out_dtype),
        ),
        grid_spec=pltpu.PrefetchScalarGridSpec(
            num_scalar_prefetch=1,      # ids_flat -> SMEM, drives the DMA gather
            grid=(grid,),
            in_specs=[
                pl.BlockSpec((tm, 1), lambda i, ids: (i, 0)),    # token-type ids
                pl.BlockSpec(memory_space=pl.ANY),               # word table, HBM
                pl.BlockSpec((tm, h), lambda i, ids: (0, 0)),    # pos tile (resident)
                pl.BlockSpec(type_f.shape, lambda i, ids: (0, 0)),  # type table
                pl.BlockSpec((1, h), lambda i, ids: (0, 0)),     # LN gamma
                pl.BlockSpec((1, h), lambda i, ids: (0, 0)),     # LN beta
            ],
            out_specs=(
                pl.BlockSpec((tm, h), lambda i, ids: (i, 0)),    # embeddings
                pl.BlockSpec((tm, h), lambda i, ids: (i, 0)),    # inputs_embeds
            ),
            scratch_shapes=[
                pltpu.VMEM((tm, h), word_table.dtype),           # gather buffer
                pltpu.SemaphoreType.DMA((nbuf,)),
            ],
        ),
        compiler_params=pltpu.CompilerParams(
            dimension_semantics=("parallel",),
        ),
    )(ids_flat, tt_col, word_table, pos_tile, type_f, gamma, beta)

    return (emb_flat.reshape(b, c, s, h), inp_flat.reshape(b, c, s, h))


def _reference(input_ids, token_type_ids, word, pos, typ, gamma, beta, eps):
    """Pure-JAX reference mirroring the PyTorch forward (default path)."""
    inputs_embeds = jnp.take(word, input_ids, axis=0)            # (B,C,S,H)
    type_emb = jnp.take(typ, token_type_ids, axis=0)             # (B,C,S,H)
    pos_emb = pos[None, None, :, :]                              # (1,1,S,H)
    emb = inputs_embeds + type_emb + pos_emb
    mean = jnp.mean(emb, axis=-1, keepdims=True)
    var = jnp.mean((emb - mean) ** 2, axis=-1, keepdims=True)
    normed = (emb - mean) * lax.rsqrt(var + eps) * gamma + beta
    return normed, inputs_embeds


if __name__ == "__main__":
    # Small shapes consistent with the module:
    #   batch=2, max_num_class=2, seq=8, hidden=128 (lane-dense),
    #   vocab_size=256, type_vocab_size=2, max_position_embeddings=seq.
    B, C, S, H = 2, 2, 8, 128
    V, T = 256, 2
    PAD_ID = 0
    EPS = 1e-12

    key = jax.random.PRNGKey(0)
    k_ids, k_tt, k_w, k_p, k_t = jax.random.split(key, 5)

    input_ids = jax.random.randint(k_ids, (B, C, S), 0, V, dtype=jnp.int32)
    token_type_ids = jax.random.randint(k_tt, (B, C, S), 0, T, dtype=jnp.int32)

    word_table = 0.02 * jax.random.normal(k_w, (V, H), dtype=jnp.float32)
    word_table = word_table.at[PAD_ID].set(0.0)   # padding_idx row (zero-init)
    pos_table = 0.02 * jax.random.normal(k_p, (S, H), dtype=jnp.float32)
    type_table = 0.02 * jax.random.normal(k_t, (T, H), dtype=jnp.float32)
    ln_weight = jnp.ones((H,), dtype=jnp.float32)
    ln_bias = jnp.zeros((H,), dtype=jnp.float32)

    emb, inp = bert_embeddings(
        input_ids, token_type_ids, word_table, pos_table, type_table,
        ln_weight, ln_bias, eps=EPS,
    )
    jax.block_until_ready((emb, inp))

    ref_emb, ref_inp = _reference(
        input_ids, token_type_ids, word_table, pos_table, type_table,
        ln_weight, ln_bias, EPS,
    )
    assert emb.shape == (B, C, S, H) and inp.shape == (B, C, S, H)
    assert np.allclose(np.asarray(inp), np.asarray(ref_inp), atol=1e-5,
                       rtol=1e-5), "inputs_embeds mismatch"
    assert np.allclose(np.asarray(emb), np.asarray(ref_emb), atol=1e-4,
                       rtol=1e-4), "embeddings mismatch"

    print("KERNEL_OK")
</pallas_src>

<mosaic_0001>
module attributes {stable_mosaic.version = 11 : i64} {
  func.func @_bert_embeddings_kernel(%arg0: i32, %arg1: memref<32xi32, #tpu.memory_space<smem>>, %arg2: memref<16x1xi32, #tpu.memory_space<vmem>>, %arg3: memref<256x128xf32, #tpu.memory_space<any>>, %arg4: memref<16x128xf32, #tpu.memory_space<vmem>>, %arg5: memref<2x128xf32, #tpu.memory_space<vmem>>, %arg6: memref<1x128xf32, #tpu.memory_space<vmem>>, %arg7: memref<1x128xf32, #tpu.memory_space<vmem>>, %arg8: memref<16x128xf32, #tpu.memory_space<vmem>>, %arg9: memref<16x128xf32, #tpu.memory_space<vmem>>, %arg10: memref<16x128xf32, #tpu.memory_space<vmem>>, %arg11: memref<8x!tpu.dma_semaphore, #tpu.memory_space<semaphore_mem>>) attributes {dimension_semantics = [#tpu.dimension_semantics<parallel>], iteration_bounds = array<i64: 2>, scalar_prefetch = 1 : i64, scratch_operands = 2 : i64, tpu.core_type = #tpu.core_type<tc>, window_params = [{transform_indices = @transform_0, window_bounds = array<i64: 16, 1>}, {}, {pipeline_mode = #tpu.pipeline_mode<synchronous>, transform_indices = @transform_2, window_bounds = array<i64: 16, 128>}, {pipeline_mode = #tpu.pipeline_mode<synchronous>, transform_indices = @transform_3, window_bounds = array<i64: 2, 128>}, {pipeline_mode = #tpu.pipeline_mode<synchronous>, transform_indices = @transform_4, window_bounds = array<i64: 1, 128>}, {pipeline_mode = #tpu.pipeline_mode<synchronous>, transform_indices = @transform_5, window_bounds = array<i64: 1, 128>}, {transform_indices = @transform_6, window_bounds = array<i64: 16, 128>}, {transform_indices = @transform_7, window_bounds = array<i64: 16, 128>}]} {
    %c16_i32 = arith.constant 16 : i32
    %0 = arith.muli %arg0, %c16_i32 : i32
    %c0_i32 = arith.constant 0 : i32
    %1 = arith.addi %0, %c0_i32 : i32
    %2 = arith.index_cast %1 : i32 to index
    %3 = memref.load %arg1[%2] : memref<32xi32, #tpu.memory_space<smem>>
    %c0_i32_0 = arith.constant 0 : i32
    %c0_i32_1 = arith.constant 0 : i32
    %c0_i32_2 = arith.constant 0 : i32
    %4 = tpu.memref_slice %arg3[%3, %c0_i32_2] : memref<256x128xf32, #tpu.memory_space<any>> -> memref<1x128xf32, #tpu.memory_space<any>>
    %5 = tpu.memref_squeeze %4 : memref<1x128xf32, #tpu.memory_space<any>> -> memref<128xf32, #tpu.memory_space<any>>
    %c0_i32_3 = arith.constant 0 : i32
    %6 = tpu.memref_slice %arg10[%c0_i32_0, %c0_i32_3] : memref<16x128xf32, #tpu.memory_space<vmem>> -> memref<1x128xf32, #tpu.memory_space<vmem>>
    %7 = tpu.memref_squeeze %6 : memref<1x128xf32, #tpu.memory_space<vmem>> -> memref<128xf32, #tpu.memory_space<vmem>>
    %8 = tpu.memref_slice %arg11[%c0_i32_1] : memref<8x!tpu.dma_semaphore, #tpu.memory_space<semaphore_mem>> -> memref<1x!tpu.dma_semaphore, #tpu.memory_space<semaphore_mem>>
    %9 = tpu.memref_squeeze %8 : memref<1x!tpu.dma_semaphore, #tpu.memory_space<semaphore_mem>> -> memref<!tpu.dma_semaphore, #tpu.memory_space<semaphore_mem>>
    tpu.enqueue_dma source(%5 : memref<128xf32, #tpu.memory_space<any>>) target(%7 : memref<128xf32, #tpu.memory_space<vmem>>) target_semaphore(%9 : memref<!tpu.dma_semaphore, #tpu.memory_space<semaphore_mem>>)
    %c1_i32 = arith.constant 1 : i32
    %10 = arith.addi %0, %c1_i32 : i32
    %11 = arith.index_cast %10 : i32 to index
    %12 = memref.load %arg1[%11] : memref<32xi32, #tpu.memory_space<smem>>
    %c1_i32_4 = arith.constant 1 : i32
    %c1_i32_5 = arith.constant 1 : i32
    %c0_i32_6 = arith.constant 0 : i32
    %13 = tpu.memref_slice %arg3[%12, %c0_i32_6] : memref<256x128xf32, #tpu.memory_space<any>> -> memref<1x128xf32, #tpu.memory_space<any>>
    %14 = tpu.memref_squeeze %13 : memref<1x128xf32, #tpu.memory_space<any>> -> memref<128xf32, #tpu.memory_space<any>>
    %c0_i32_7 = arith.constant 0 : i32
    %15 = tpu.memref_slice %arg10[%c1_i32_4, %c0_i32_7] : memref<16x128xf32, #tpu.memory_space<vmem>> -> memref<1x128xf32, #tpu.memory_space<vmem>>
    %16 = tpu.memref_squeeze %15 : memref<1x128xf32, #tpu.memory_space<vmem>> -> memref<128xf32, #tpu.memory_space<vmem>>
    %17 = tpu.memref_slice %arg11[%c1_i32_5] : memref<8x!tpu.dma_semaphore, #tpu.memory_space<semaphore_mem>> -> memref<1x!tpu.dma_semaphore, #tpu.memory_space<semaphore_mem>>
    %18 = tpu.memref_squeeze %17 : memref<1x!tpu.dma_semaphore, #tpu.memory_space<semaphore_mem>> -> memref<!tpu.dma_semaphore, #tpu.memory_space<semaphore_mem>>
    tpu.enqueue_dma source(%14 : memref<128xf32, #tpu.memory_space<any>>) target(%16 : memref<128xf32, #tpu.memory_space<vmem>>) target_semaphore(%18 : memref<!tpu.dma_semaphore, #tpu.memory_space<semaphore_mem>>)
    %c2_i32 = arith.constant 2 : i32
    %19 = arith.addi %0, %c2_i32 : i32
    %20 = arith.index_cast %19 : i32 to index
    %21 = memref.load %arg1[%20] : memref<32xi32, #tpu.memory_space<smem>>
    %c2_i32_8 = arith.constant 2 : i32
    %c2_i32_9 = arith.constant 2 : i32
    %c0_i32_10 = arith.constant 0 : i32
    %22 = tpu.memref_slice %arg3[%21, %c0_i32_10] : memref<256x128xf32, #tpu.memory_space<any>> -> memref<1x128xf32, #tpu.memory_space<any>>
    %23 = tpu.memref_squeeze %22 : memref<1x128xf32, #tpu.memory_space<any>> -> memref<128xf32, #tpu.memory_space<any>>
    %c0_i32_11 = arith.constant 0 : i32
    %24 = tpu.memref_slice %arg10[%c2_i32_8, %c0_i32_11] : memref<16x128xf32, #tpu.memory_space<vmem>> -> memref<1x128xf32, #tpu.memory_space<vmem>>
    %25 = tpu.memref_squeeze %24 : memref<1x128xf32, #tpu.memory_space<vmem>> -> memref<128xf32, #tpu.memory_space<vmem>>
    %26 = tpu.memref_slice %arg11[%c2_i32_9] : memref<8x!tpu.dma_semaphore, #tpu.memory_space<semaphore_mem>> -> memref<1x!tpu.dma_semaphore, #tpu.memory_space<semaphore_mem>>
    %27 = tpu.memref_squeeze %26 : memref<1x!tpu.dma_semaphore, #tpu.memory_space<semaphore_mem>> -> memref<!tpu.dma_semaphore, #tpu.memory_space<semaphore_mem>>
    tpu.enqueue_dma source(%23 : memref<128xf32, #tpu.memory_space<any>>) target(%25 : memref<128xf32, #tpu.memory_space<vmem>>) target_semaphore(%27 : memref<!tpu.dma_semaphore, #tpu.memory_space<semaphore_mem>>)
    %c3_i32 = arith.constant 3 : i32
    %28 = arith.addi %0, %c3_i32 : i32
    %29 = arith.index_cast %28 : i32 to index
    %30 = memref.load %arg1[%29] : memref<32xi32, #tpu.memory_space<smem>>
    %c3_i32_12 = arith.constant 3 : i32
    %c3_i32_13 = arith.constant 3 : i32
    %c0_i32_14 = arith.constant 0 : i32
    %31 = tpu.memref_slice %arg3[%30, %c0_i32_14] : memref<256x128xf32, #tpu.memory_space<any>> -> memref<1x128xf32, #tpu.memory_space<any>>
    %32 = tpu.memref_squeeze %31 : memref<1x128xf32, #tpu.memory_space<any>> -> memref<128xf32, #tpu.memory_space<any>>
    %c0_i32_15 = arith.constant 0 : i32
    %33 = tpu.memref_slice %arg10[%c3_i32_12, %c0_i32_15] : memref<16x128xf32, #tpu.memory_space<vmem>> -> memref<1x128xf32, #tpu.memory_space<vmem>>
    %34 = tpu.memref_squeeze %33 : memref<1x128xf32, #tpu.memory_space<vmem>> -> memref<128xf32, #tpu.memory_space<vmem>>
    %35 = tpu.memref_slice %arg11[%c3_i32_13] : memref<8x!tpu.dma_semaphore, #tpu.memory_space<semaphore_mem>> -> memref<1x!tpu.dma_semaphore, #tpu.memory_space<semaphore_mem>>
    %36 = tpu.memref_squeeze %35 : memref<1x!tpu.dma_semaphore, #tpu.memory_space<semaphore_mem>> -> memref<!tpu.dma_semaphore, #tpu.memory_space<semaphore_mem>>
    tpu.enqueue_dma source(%32 : memref<128xf32, #tpu.memory_space<any>>) target(%34 : memref<128xf32, #tpu.memory_space<vmem>>) target_semaphore(%36 : memref<!tpu.dma_semaphore, #tpu.memory_space<semaphore_mem>>)
    %c4_i32 = arith.constant 4 : i32
    %37 = arith.addi %0, %c4_i32 : i32
    %38 = arith.index_cast %37 : i32 to index
    %39 = memref.load %arg1[%38] : memref<32xi32, #tpu.memory_space<smem>>
    %c4_i32_16 = arith.constant 4 : i32
    %c4_i32_17 = arith.constant 4 : i32
    %c0_i32_18 = arith.constant 0 : i32
    %40 = tpu.memref_slice %arg3[%39, %c0_i32_18] : memref<256x128xf32, #tpu.memory_space<any>> -> memref<1x128xf32, #tpu.memory_space<any>>
    %41 = tpu.memref_squeeze %40 : memref<1x128xf32, #tpu.memory_space<any>> -> memref<128xf32, #tpu.memory_space<any>>
    %c0_i32_19 = arith.constant 0 : i32
    %42 = tpu.memref_slice %arg10[%c4_i32_16, %c0_i32_19] : memref<16x128xf32, #tpu.memory_space<vmem>> -> memref<1x128xf32, #tpu.memory_space<vmem>>
    %43 = tpu.memref_squeeze %42 : memref<1x128xf32, #tpu.memory_space<vmem>> -> memref<128xf32, #tpu.memory_space<vmem>>
    %44 = tpu.memref_slice %arg11[%c4_i32_17] : memref<8x!tpu.dma_semaphore, #tpu.memory_space<semaphore_mem>> -> memref<1x!tpu.dma_semaphore, #tpu.memory_space<semaphore_mem>>
    %45 = tpu.memref_squeeze %44 : memref<1x!tpu.dma_semaphore, #tpu.memory_space<semaphore_mem>> -> memref<!tpu.dma_semaphore, #tpu.memory_space<semaphore_mem>>
    tpu.enqueue_dma source(%41 : memref<128xf32, #tpu.memory_space<any>>) target(%43 : memref<128xf32, #tpu.memory_space<vmem>>) target_semaphore(%45 : memref<!tpu.dma_semaphore, #tpu.memory_space<semaphore_mem>>)
    %c5_i32 = arith.constant 5 : i32
    %46 = arith.addi %0, %c5_i32 : i32
    %47 = arith.index_cast %46 : i32 to index
    %48 = memref.load %arg1[%47] : memref<32xi32, #tpu.memory_space<smem>>
    %c5_i32_20 = arith.constant 5 : i32
    %c5_i32_21 = arith.constant 5 : i32
    %c0_i32_22 = arith.constant 0 : i32
    %49 = tpu.memref_slice %arg3[%48, %c0_i32_22] : memref<256x128xf32, #tpu.memory_space<any>> -> memref<1x128xf32, #tpu.memory_space<any>>
    %50 = tpu.memref_squeeze %49 : memref<1x128xf32, #tpu.memory_space<any>> -> memref<128xf32, #tpu.memory_space<any>>
    %c0_i32_23 = arith.constant 0 : i32
    %51 = tpu.memref_slice %arg10[%c5_i32_20, %c0_i32_23] : memref<16x128xf32, #tpu.memory_space<vmem>> -> memref<1x128xf32, #tpu.memory_space<vmem>>
    %52 = tpu.memref_squeeze %51 : memref<1x128xf32, #tpu.memory_space<vmem>> -> memref<128xf32, #tpu.memory_space<vmem>>
    %53 = tpu.memref_slice %arg11[%c5_i32_21] : memref<8x!tpu.dma_semaphore, #tpu.memory_space<semaphore_mem>> -> memref<1x!tpu.dma_semaphore, #tpu.memory_space<semaphore_mem>>
    %54 = tpu.memref_squeeze %53 : memref<1x!tpu.dma_semaphore, #tpu.memory_space<semaphore_mem>> -> memref<!tpu.dma_semaphore, #tpu.memory_space<semaphore_mem>>
    tpu.enqueue_dma source(%50 : memref<128xf32, #tpu.memory_space<any>>) target(%52 : memref<128xf32, #tpu.memory_space<vmem>>) target_semaphore(%54 : memref<!tpu.dma_semaphore, #tpu.memory_space<semaphore_mem>>)
    %c6_i32 = arith.constant 6 : i32
    %55 = arith.addi %0, %c6_i32 : i32
    %56 = arith.index_cast %55 : i32 to index
    %57 = memref.load %arg1[%56] : memref<32xi32, #tpu.memory_space<smem>>
    %c6_i32_24 = arith.constant 6 : i32
    %c6_i32_25 = arith.constant 6 : i32
    %c0_i32_26 = arith.constant 0 : i32
    %58 = tpu.memref_slice %arg3[%57, %c0_i32_26] : memref<256x128xf32, #tpu.memory_space<any>> -> memref<1x128xf32, #tpu.memory_space<any>>
    %59 = tpu.memref_squeeze %58 : memref<1x128xf32, #tpu.memory_space<any>> -> memref<128xf32, #tpu.memory_space<any>>
    %c0_i32_27 = arith.constant 0 : i32
    %60 = tpu.memref_slice %arg10[%c6_i32_24, %c0_i32_27] : memref<16x128xf32, #tpu.memory_space<vmem>> -> memref<1x128xf32, #tpu.memory_space<vmem>>
    %61 = tpu.memref_squeeze %60 : memref<1x128xf32, #tpu.memory_space<vmem>> -> memref<128xf32, #tpu.memory_space<vmem>>
    %62 = tpu.memref_slice %arg11[%c6_i32_25] : memref<8x!tpu.dma_semaphore, #tpu.memory_space<semaphore_mem>> -> memref<1x!tpu.dma_semaphore, #tpu.memory_space<semaphore_mem>>
    %63 = tpu.memref_squeeze %62 : memref<1x!tpu.dma_semaphore, #tpu.memory_space<semaphore_mem>> -> memref<!tpu.dma_semaphore, #tpu.memory_space<semaphore_mem>>
    tpu.enqueue_dma source(%59 : memref<128xf32, #tpu.memory_space<any>>) target(%61 : memref<128xf32, #tpu.memory_space<vmem>>) target_semaphore(%63 : memref<!tpu.dma_semaphore, #tpu.memory_space<semaphore_mem>>)
    %c7_i32 = arith.constant 7 : i32
    %64 = arith.addi %0, %c7_i32 : i32
    %65 = arith.index_cast %64 : i32 to index
    %66 = memref.load %arg1[%65] : memref<32xi32, #tpu.memory_space<smem>>
    %c7_i32_28 = arith.constant 7 : i32
    %c7_i32_29 = arith.constant 7 : i32
    %c0_i32_30 = arith.constant 0 : i32
    %67 = tpu.memref_slice %arg3[%66, %c0_i32_30] : memref<256x128xf32, #tpu.memory_space<any>> -> memref<1x128xf32, #tpu.memory_space<any>>
    %68 = tpu.memref_squeeze %67 : memref<1x128xf32, #tpu.memory_space<any>> -> memref<128xf32, #tpu.memory_space<any>>
    %c0_i32_31 = arith.constant 0 : i32
    %69 = tpu.memref_slice %arg10[%c7_i32_28, %c0_i32_31] : memref<16x128xf32, #tpu.memory_space<vmem>> -> memref<1x128xf32, #tpu.memory_space<vmem>>
    %70 = tpu.memref_squeeze %69 : memref<1x128xf32, #tpu.memory_space<vmem>> -> memref<128xf32, #tpu.memory_space<vmem>>
    %71 = tpu.memref_slice %arg11[%c7_i32_29] : memref<8x!tpu.dma_semaphore, #tpu.memory_space<semaphore_mem>> -> memref<1x!tpu.dma_semaphore, #tpu.memory_space<semaphore_mem>>
    %72 = tpu.memref_squeeze %71 : memref<1x!tpu.dma_semaphore, #tpu.memory_space<semaphore_mem>> -> memref<!tpu.dma_semaphore, #tpu.memory_space<semaphore_mem>>
    tpu.enqueue_dma source(%68 : memref<128xf32, #tpu.memory_space<any>>) target(%70 : memref<128xf32, #tpu.memory_space<vmem>>) target_semaphore(%72 : memref<!tpu.dma_semaphore, #tpu.memory_space<semaphore_mem>>)
    %c0_i32_32 = arith.constant 0 : i32
    %c16_i32_33 = arith.constant 16 : i32
    %73 = arith.addi %c0_i32_32, %c16_i32_33 : i32
    %c1_i32_34 = arith.constant 1 : i32
    scf.for %arg12 = %c0_i32_32 to %73 step %c1_i32_34  : i32 {
      %c1_i32_57 = arith.constant 1 : i32
      %114 = arith.muli %arg12, %c1_i32_57 : i32
      %c0_i32_58 = arith.constant 0 : i32
      %115 = arith.addi %c0_i32_58, %114 : i32
      %c8_i32 = arith.constant 8 : i32
      %c0_i32_59 = arith.constant 0 : i32
      %116 = arith.cmpi eq, %c8_i32, %c0_i32_59 : i32
      %c1_i32_60 = arith.constant 1 : i32
      %117 = arith.select %116, %c1_i32_60, %c8_i32 : i32
      %118 = arith.remsi %115, %117 : i32
      %c0_i32_61 = arith.constant 0 : i32
      %119 = arith.cmpi ne, %118, %c0_i32_61 : i32
      %c0_i32_62 = arith.constant 0 : i32
      %120 = arith.cmpi slt, %118, %c0_i32_62 : i32
      %c0_i32_63 = arith.constant 0 : i32
      %121 = arith.cmpi slt, %117, %c0_i32_63 : i32
      %122 = arith.xori %120, %121 : i1
      %123 = arith.andi %122, %119 : i1
      %124 = arith.addi %118, %117 : i32
      %125 = arith.select %123, %124, %118 : i32
      %c0_i32_64 = arith.constant 0 : i32
      %c0_i32_65 = arith.constant 0 : i32
      %126 = tpu.memref_slice %arg3[%c0_i32_64, %c0_i32_65] : memref<256x128xf32, #tpu.memory_space<any>> -> memref<1x128xf32, #tpu.memory_space<any>>
      %127 = tpu.memref_squeeze %126 : memref<1x128xf32, #tpu.memory_space<any>> -> memref<128xf32, #tpu.memory_space<any>>
      %c0_i32_66 = arith.constant 0 : i32
      %128 = tpu.memref_slice %arg10[%115, %c0_i32_66] : memref<16x128xf32, #tpu.memory_space<vmem>> -> memref<1x128xf32, #tpu.memory_space<vmem>>
      %129 = tpu.memref_squeeze %128 : memref<1x128xf32, #tpu.memory_space<vmem>> -> memref<128xf32, #tpu.memory_space<vmem>>
      %130 = tpu.memref_slice %arg11[%125] : memref<8x!tpu.dma_semaphore, #tpu.memory_space<semaphore_mem>> -> memref<1x!tpu.dma_semaphore, #tpu.memory_space<semaphore_mem>>
      %131 = tpu.memref_squeeze %130 : memref<1x!tpu.dma_semaphore, #tpu.memory_space<semaphore_mem>> -> memref<!tpu.dma_semaphore, #tpu.memory_space<semaphore_mem>>
      tpu.wait_dma2 semaphore(%131 : memref<!tpu.dma_semaphore, #tpu.memory_space<semaphore_mem>>) src(%127 : memref<128xf32, #tpu.memory_space<any>>) dst(%129 : memref<128xf32, #tpu.memory_space<vmem>>)
      %c8_i32_67 = arith.constant 8 : i32
      %132 = arith.addi %115, %c8_i32_67 : i32
      %c16_i32_68 = arith.constant 16 : i32
      %133 = arith.cmpi slt, %132, %c16_i32_68 : i32
      %134 = arith.extui %133 : i1 to i32
      %c0_i32_69 = arith.constant 0 : i32
      %135 = arith.cmpi ne, %134, %c0_i32_69 : i32
      scf.if %135 {
        %c8_i32_70 = arith.constant 8 : i32
        %136 = arith.addi %115, %c8_i32_70 : i32
        %137 = arith.addi %0, %136 : i32
        %138 = arith.index_cast %137 : i32 to index
        %139 = memref.load %arg1[%138] : memref<32xi32, #tpu.memory_space<smem>>
        %c8_i32_71 = arith.constant 8 : i32
        %c0_i32_72 = arith.constant 0 : i32
        %140 = arith.cmpi eq, %c8_i32_71, %c0_i32_72 : i32
        %c1_i32_73 = arith.constant 1 : i32
        %141 = arith.select %140, %c1_i32_73, %c8_i32_71 : i32
        %142 = arith.remsi %136, %141 : i32
        %c0_i32_74 = arith.constant 0 : i32
        %143 = arith.cmpi ne, %142, %c0_i32_74 : i32
        %c0_i32_75 = arith.constant 0 : i32
        %144 = arith.cmpi slt, %142, %c0_i32_75 : i32
        %c0_i32_76 = arith.constant 0 : i32
        %145 = arith.cmpi slt, %141, %c0_i32_76 : i32
        %146 = arith.xori %144, %145 : i1
        %147 = arith.andi %146, %143 : i1
        %148 = arith.addi %142, %141 : i32
        %149 = arith.select %147, %148, %142 : i32
        %c0_i32_77 = arith.constant 0 : i32
        %150 = tpu.memref_slice %arg3[%139, %c0_i32_77] : memref<256x128xf32, #tpu.memory_space<any>> -> memref<1x128xf32, #tpu.memory_space<any>>
        %151 = tpu.memref_squeeze %150 : memref<1x128xf32, #tpu.memory_space<any>> -> memref<128xf32, #tpu.memory_space<any>>
        %c0_i32_78 = arith.constant 0 : i32
        %152 = tpu.memref_slice %arg10[%136, %c0_i32_78] : memref<16x128xf32, #tpu.memory_space<vmem>> -> memref<1x128xf32, #tpu.memory_space<vmem>>
        %153 = tpu.memref_squeeze %152 : memref<1x128xf32, #tpu.memory_space<vmem>> -> memref<128xf32, #tpu.memory_space<vmem>>
        %154 = tpu.memref_slice %arg11[%149] : memref<8x!tpu.dma_semaphore, #tpu.memory_space<semaphore_mem>> -> memref<1x!tpu.dma_semaphore, #tpu.memory_space<semaphore_mem>>
        %155 = tpu.memref_squeeze %154 : memref<1x!tpu.dma_semaphore, #tpu.memory_space<semaphore_mem>> -> memref<!tpu.dma_semaphore, #tpu.memory_space<semaphore_mem>>
        tpu.enqueue_dma source(%151 : memref<128xf32, #tpu.memory_space<any>>) target(%153 : memref<128xf32, #tpu.memory_space<vmem>>) target_semaphore(%155 : memref<!tpu.dma_semaphore, #tpu.memory_space<semaphore_mem>>)
      } else {
      }
    }
    %c16_i32_35 = arith.constant 16 : i32
    %c0 = arith.constant 0 : index
    %c0_36 = arith.constant 0 : index
    %74 = vector.load %arg10[%c0, %c0_36] : memref<16x128xf32, #tpu.memory_space<vmem>>, vector<16x128xf32>
    %c0_37 = arith.constant 0 : index
    %c0_38 = arith.constant 0 : index
    %75 = vector.load %arg2[%c0_37, %c0_38] : memref<16x1xi32, #tpu.memory_space<vmem>>, vector<16x1xi32>
    %c0_39 = arith.constant 0 : index
    %c0_40 = arith.constant 0 : index
    %76 = vector.load %arg5[%c0_39, %c0_40] : memref<2x128xf32, #tpu.memory_space<vmem>>, vector<1x128xf32>
    %c1_i32_41 = arith.constant 1 : i32
    %77 = vector.broadcast %c1_i32_41 : i32 to vector<16x1xi32>
    %78 = arith.cmpi eq, %75, %77 : vector<16x1xi32>
    %c1 = arith.constant 1 : index
    %c0_42 = arith.constant 0 : index
    %79 = vector.load %arg5[%c1, %c0_42] : memref<2x128xf32, #tpu.memory_space<vmem>>, vector<1x128xf32>
    %80 = vector.shape_cast %78 : vector<16x1xi1> to vector<16x1xi1>
    %81 = vector.broadcast %80 : vector<16x1xi1> to vector<16x128xi1>
    %82 = vector.shape_cast %79 : vector<1x128xf32> to vector<1x128xf32>
    %83 = vector.broadcast %82 : vector<1x128xf32> to vector<16x128xf32>
    %84 = vector.shape_cast %76 : vector<1x128xf32> to vector<1x128xf32>
    %85 = vector.broadcast %84 : vector<1x128xf32> to vector<16x128xf32>
    %86 = arith.select %81, %83, %85 : vector<16x128xi1>, vector<16x128xf32>
    %87 = arith.addf %74, %86 : vector<16x128xf32>
    %c0_43 = arith.constant 0 : index
    %c0_44 = arith.constant 0 : index
    %88 = vector.load %arg4[%c0_43, %c0_44] : memref<16x128xf32, #tpu.memory_space<vmem>>, vector<16x128xf32>
    %89 = arith.addf %87, %88 : vector<16x128xf32>
    %cst = arith.constant dense<0.000000e+00> : vector<16xf32>
    %90 = vector.multi_reduction <add>, %89, %cst [1] : vector<16x128xf32> to vector<16xf32>
    %91 = vector.shape_cast %90 : vector<16xf32> to vector<16x1xf32>
    %cst_45 = arith.constant 1.280000e+02 : f32
    %92 = vector.broadcast %cst_45 : f32 to vector<16x1xf32>
    %93 = arith.divf %91, %92 : vector<16x1xf32>
    %94 = vector.broadcast %93 : vector<16x1xf32> to vector<16x128xf32>
    %95 = arith.subf %89, %94 : vector<16x128xf32>
    %96 = arith.mulf %95, %95 : vector<16x128xf32>
    %cst_46 = arith.constant dense<0.000000e+00> : vector<16xf32>
    %97 = vector.multi_reduction <add>, %96, %cst_46 [1] : vector<16x128xf32> to vector<16xf32>
    %98 = vector.shape_cast %97 : vector<16xf32> to vector<16x1xf32>
    %cst_47 = arith.constant 1.280000e+02 : f32
    %99 = vector.broadcast %cst_47 : f32 to vector<16x1xf32>
    %100 = arith.divf %98, %99 : vector<16x1xf32>
    %cst_48 = arith.constant 9.99999996E-13 : f32
    %101 = vector.broadcast %cst_48 : f32 to vector<16x1xf32>
    %102 = arith.addf %100, %101 : vector<16x1xf32>
    %103 = math.rsqrt %102 : vector<16x1xf32>
    %104 = vector.broadcast %103 : vector<16x1xf32> to vector<16x128xf32>
    %105 = arith.mulf %95, %104 : vector<16x128xf32>
    %c0_49 = arith.constant 0 : index
    %c0_50 = arith.constant 0 : index
    %106 = vector.load %arg6[%c0_49, %c0_50] : memref<1x128xf32, #tpu.memory_space<vmem>>, vector<1x128xf32>
    %107 = vector.broadcast %106 : vector<1x128xf32> to vector<16x128xf32>
    %108 = arith.mulf %105, %107 : vector<16x128xf32>
    %c0_51 = arith.constant 0 : index
    %c0_52 = arith.constant 0 : index
    %109 = vector.load %arg7[%c0_51, %c0_52] : memref<1x128xf32, #tpu.memory_space<vmem>>, vector<1x128xf32>
    %110 = vector.broadcast %109 : vector<1x128xf32> to vector<16x128xf32>
    %111 = arith.addf %108, %110 : vector<16x128xf32>
    %c0_53 = arith.constant 0 : index
    %c0_54 = arith.constant 0 : index
    %112 = vector.load %arg8[%c0_53, %c0_54] : memref<16x128xf32, #tpu.memory_space<vmem>>, vector<16x128xf32>
    tpu.vector_store %arg8[%c0_53, %c0_54], %111 {strides = array<i32>} : memref<16x128xf32, #tpu.memory_space<vmem>>, vector<16x128xf32>,
    %c0_55 = arith.constant 0 : index
    %c0_56 = arith.constant 0 : index
    %113 = vector.load %arg9[%c0_55, %c0_56] : memref<16x128xf32, #tpu.memory_space<vmem>>, vector<16x128xf32>
    tpu.vector_store %arg9[%c0_55, %c0_56], %74 {strides = array<i32>} : memref<16x128xf32, #tpu.memory_space<vmem>>, vector<16x128xf32>,
    return
  }
  func.func @transform_0(%arg0: i32, %arg1: memref<32xi32, #tpu.memory_space<smem>>) -> (i32, i32) {
    %c0_i32 = arith.constant 0 : i32
    %c0_i32_0 = arith.constant 0 : i32
    return %arg0, %c0_i32 : i32, i32
  }
  func.func @transform_2(%arg0: i32, %arg1: memref<32xi32, #tpu.memory_space<smem>>) -> (i32, i32) {
    %c0_i32 = arith.constant 0 : i32
    %c0_i32_0 = arith.constant 0 : i32
    %c0_i32_1 = arith.constant 0 : i32
    return %c0_i32, %c0_i32_0 : i32, i32
  }
  func.func @transform_3(%arg0: i32, %arg1: memref<32xi32, #tpu.memory_space<smem>>) -> (i32, i32) {
    %c0_i32 = arith.constant 0 : i32
    %c0_i32_0 = arith.constant 0 : i32
    %c0_i32_1 = arith.constant 0 : i32
    return %c0_i32, %c0_i32_0 : i32, i32
  }
  func.func @transform_4(%arg0: i32, %arg1: memref<32xi32, #tpu.memory_space<smem>>) -> (i32, i32) {
    %c0_i32 = arith.constant 0 : i32
    %c0_i32_0 = arith.constant 0 : i32
    %c0_i32_1 = arith.constant 0 : i32
    return %c0_i32, %c0_i32_0 : i32, i32
  }
  func.func @transform_5(%arg0: i32, %arg1: memref<32xi32, #tpu.memory_space<smem>>) -> (i32, i32) {
    %c0_i32 = arith.constant 0 : i32
    %c0_i32_0 = arith.constant 0 : i32
    %c0_i32_1 = arith.constant 0 : i32
    return %c0_i32, %c0_i32_0 : i32, i32
  }
  func.func @transform_6(%arg0: i32, %arg1: memref<32xi32, #tpu.memory_space<smem>>) -> (i32, i32) {
    %c0_i32 = arith.constant 0 : i32
    %c0_i32_0 = arith.constant 0 : i32
    return %arg0, %c0_i32 : i32, i32
  }
  func.func @transform_7(%arg0: i32, %arg1: memref<32xi32, #tpu.memory_space<smem>>) -> (i32, i32) {
    %c0_i32 = arith.constant 0 : i32
    %c0_i32_0 = arith.constant 0 : i32
    return %arg0, %c0_i32 : i32, i32
  }
}

</mosaic_0001>

<llo_original>
// kernel: tpu_custom_call.1
$region0: #{tpu_custom_call.1}
  #allocation0 [shape = 'u32[]', space=smem, size = 0x4, offset = 0x4, fixed_abs, tag = 'smem constant byte address 0x4 - core index']
  #allocation1 [shape = 'u32[72,128]{1,0:T(1,128)}', space=vmem, size = 0x9000, scoped, tag = 'internal scratch']
  #allocation2 [shape = 'f32[16,128]{1,0:T(8,128)}', space=vmem, size = 0x2000, scoped, tag = 'scratch operand']
  #allocation3 [shape = 's32[8]{0}', space=sflag, size = 0x20, scoped, tag = 'scratch operand']
  #allocation4 [shape = 's32[1]{0}', space=sflag, size = 0x4, scoped, tag = 'scoped memory for tpu_custom_call.1']
  #allocation5 [shape = 'u8[512]{0}', space=smem, size = 0x200, scoped, tag = 'prefetched SMEM operand 0']
  #allocation10 [shape = 's32[]', space=sflag, size = 0x4, offset = 0, fixed_abs, tag = 'sflag constant byte address 0x0 - dummy sync flag']
  #allocation11 [shape = 's32[]', space=sflag, size = 0x4, offset = 0, fixed_abs, tag = 'sflag constant byte address 0x0 - dummy sync flag']
  #allocation12 [shape = 'u32[]', space=smem, size = 0x4, offset = 0x44, fixed_abs, tag = 'smem constant byte address 0x44 - assertion arg 0']
  #allocation13 [shape = 'u32[]', space=smem, size = 0x4, offset = 0x48, fixed_abs, tag = 'smem constant byte address 0x48 - assertion arg 1']
  #allocation14 [shape = 's32[]', space=sflag, size = 0x4, offset = 0, fixed_abs, tag = 'sflag constant byte address 0x0 - dummy sync flag']
  #allocation15 [shape = 's32[]', space=sflag, size = 0x4, offset = 0, fixed_abs, tag = 'sflag constant byte address 0x0 - dummy sync flag']
  #allocation16 [shape = 's32[]', space=sflag, size = 0x4, offset = 0, fixed_abs, tag = 'sflag constant byte address 0x0 - dummy sync flag']
  #allocation17 [shape = 's32[]', space=sflag, size = 0x4, offset = 0, fixed_abs, tag = 'sflag constant byte address 0x0 - dummy sync flag']
  #allocation18 [shape = 's32[]', space=sflag, size = 0x4, offset = 0, fixed_abs, tag = 'sflag constant byte address 0x0 - dummy sync flag']
  #allocation19 [shape = 's32[]', space=sflag, size = 0x4, offset = 0, fixed_abs, tag = 'sflag constant byte address 0x0 - dummy sync flag']
  #allocation20 [shape = 's32[]', space=sflag, size = 0x4, offset = 0, fixed_abs, tag = 'sflag constant byte address 0x0 - dummy sync flag']
  #allocation21 [shape = 's32[]', space=sflag, size = 0x4, offset = 0, fixed_abs, tag = 'sflag constant byte address 0x0 - dummy sync flag']
  #allocation22 [shape = 's32[]', space=sflag, size = 0x4, offset = 0, fixed_abs, tag = 'sflag constant byte address 0x0 - dummy sync flag']
  #allocation23 [shape = 's32[]', space=sflag, size = 0x4, offset = 0, fixed_abs, tag = 'sflag constant byte address 0x0 - dummy sync flag']
  #allocation24 [shape = 's32[]', space=sflag, size = 0x4, offset = 0, fixed_abs, tag = 'sflag constant byte address 0x0 - dummy sync flag']
  #allocation25 [shape = 's32[]', space=sflag, size = 0x4, offset = 0, fixed_abs, tag = 'sflag constant byte address 0x0 - dummy sync flag']
  #allocation26 [shape = 's32[]', space=sflag, size = 0x4, offset = 0, fixed_abs, tag = 'sflag constant byte address 0x0 - dummy sync flag']
  #allocation27 [shape = 's32[]', space=sflag, size = 0x4, offset = 0, fixed_abs, tag = 'sflag constant byte address 0x0 - dummy sync flag']
  #allocation28 [shape = 's32[]', space=sflag, size = 0x4, offset = 0, fixed_abs, tag = 'sflag constant byte address 0x0 - dummy sync flag']
  #allocation29 [shape = 's32[]', space=sflag, size = 0x4, offset = 0, fixed_abs, tag = 'sflag constant byte address 0x0 - dummy sync flag']
  %s0 = inlined_call_operand.vmem [shape: s32[32], index: 0, kind: input, shape index: {}]
  %s1 = inlined_call_operand.vmem [shape: s32[32,1], index: 1, kind: input, shape index: {}]
  %s2 = inlined_call_operand.hbm [shape: f32[256,128], index: 2, kind: input, shape index: {}]
  %s3 = inlined_call_operand.vmem [shape: f32[16,128], index: 3, kind: input, shape index: {}]
  %s4 = inlined_call_operand.vmem [shape: f32[2,128], index: 4, kind: input, shape index: {}]
  %s5 = inlined_call_operand.vmem [shape: f32[1,128], index: 5, kind: input, shape index: {}]
  %s6 = inlined_call_operand.vmem [shape: f32[1,128], index: 6, kind: input, shape index: {}]
  %s7 = inlined_call_operand.hbm [shape: f32[32,128], index: 7, kind: output, shape index: {0}]
  %s8 = inlined_call_operand.hbm [shape: f32[32,128], index: 8, kind: output, shape index: {1}]
  %9 = xla_tuple %s7, %s8
  %s10 = sld [smem:[#allocation0]]
  $region108: #{tpu_custom_call.1} parent=0
    _
  %s12 = ssub.s32 1, %s10
  %s13 = scalar_select 0, %s12, %s10
  %s15 = sshll.u32 %s0, 4
  %s16 = int_to_ptr.vmem [resolvable:$true] %s15
  %18 = dma.vmem_to_smem %s16, 16, [#allocation5], [#allocation4]
  %20 = dma.done [#allocation4], 16
  %21 = sfence
  $region1: #{tpu_custom_call.1} parent=0
    #allocation6 [shape = 'u8[16384]{0}', space=vmem, size = 0x4000, scoped, tag = 'output window, operand 0']
    #allocation7 [shape = 's32[2]{0}', space=sflag, size = 0x8, scoped, tag = 'scoped memory for tpu_custom_call.1']
    #allocation8 [shape = 'u8[16384]{0}', space=vmem, size = 0x4000, scoped, tag = 'output window, operand 1']
    #allocation9 [shape = 's32[2]{0}', space=sflag, size = 0x8, scoped, tag = 'scoped memory for tpu_custom_call.1']
    %22 = vsyncpa [#allocation7], 0
    %s23 = scalar_lea.sflag [#allocation7], 1
    %24 = vsyncpa %s23, 0
    %25 = vsyncpa [#allocation9], 0
    %s26 = scalar_lea.sflag [#allocation9], 1
    %27 = vsyncpa %s26, 0
    loop: start=0, step=1, limit=4
    $region2: #{tpu_custom_call.1} parent=1 // loop_pre_header
      _
    $region3: #{tpu_custom_call.1} parent=1 // loop_header
      %s29 = sphi 0, %s33
      %p30 = scmp.ge.s32.totalorder %s29, 4
      %s39 = sphi 0, %s41
      %s42 = sphi 0, %s39
      %s43 = sphi 0, %s42
      %s59 = sphi 0, %s43
      %s63 = sphi 0, %s63
      %s65 = sphi 0, %s63
      %s66 = sphi 0, %s65
      %s80 = sphi 0, %s66
      %s84 = sphi 0, %s84
      %s86 = sphi 0, %s84
      %s87 = sphi 0, %s86
      %s101 = sphi 0, %s87
      %s105 = sphi 0, %s105
      %s107 = sphi 0, %s105
      %s108 = sphi 0, %s107
      %s122 = sphi 0, %s108
      %s126 = sphi 0, %s126
      %s128 = sphi 0, %s126
      %s129 = sphi 0, %s128
      %s143 = sphi 0, %s129
      %s149 = sphi 0, %s151
      %s152 = sphi 0, %s149
      %s153 = sphi 0, %s152
      %s169 = sphi 0, %s153
      %s175 = sphi 0, %s177
      %s178 = sphi 0, %s175
      %s179 = sphi 0, %s178
      %s195 = sphi 0, %s179
    $region4: #{tpu_custom_call.1} parent=1 // loop_header_branch
      %32 = sbr.rel (%p30) target = $region8
    $region5: #{tpu_custom_call.1} parent=1 // loop_body
      %s34 = ssub.s32 %s29, 1
      %s35 = ssub.s32 %s29, 2
      %s36 = sadd.s32 %s29, 1
      %s37 = ssub.s32 %s29, %s36
      %p38 = scmp.eq.s32.totalorder %s37, 0
      %s40 = sadd.s32 %s39, 1
      %s41 = scalar_select %p38, %s39, %s40
      %p44 = pneg %p38
      %p45 = scmp.eq.s32.totalorder %s29, 1
      %p46 = por %p44, %p45
      %p47 = scmp.ne.s32.totalorder %s39, %s42
      %p48 = scmp.eq.s32.totalorder %s29, 0
      %p49 = por %p47, %p48
      %p50 = scmp.ne.s32.totalorder %s39, %s42
      %p51 = scmp.eq.s32.totalorder %s34, 1
      %p52 = por %p50, %p51
      %p53 = scmp.ne.s32.totalorder %s42, %s43
      %p54 = scmp.eq.s32.totalorder %s34, 0
      %p55 = por %p53, %p54
      %p56 = scmp.ne.s32.totalorder %s42, %s43
      %p57 = scmp.eq.s32.totalorder %s35, 1
      %p58 = por %p56, %p57
      %p60 = scmp.ne.s32.totalorder %s43, %s59
      %p61 = scmp.eq.s32.totalorder %s35, 0
      %p62 = por %p60, %p61
      %s64 = sadd.s32 %s63, 1
      %p67 = scmp.eq.s32.totalorder %s29, 1
      %p68 = scmp.ne.s32.totalorder %s63, %s65
      %p69 = scmp.eq.s32.totalorder %s29, 0
      %p70 = por %p68, %p69
      %p71 = scmp.ne.s32.totalorder %s63, %s65
      %p72 = scmp.eq.s32.totalorder %s34, 1
      %p73 = por %p71, %p72
      %p74 = scmp.ne.s32.totalorder %s65, %s66
      %p75 = scmp.eq.s32.totalorder %s34, 0
      %p76 = por %p74, %p75
      %p77 = scmp.ne.s32.totalorder %s65, %s66
      %p78 = scmp.eq.s32.totalorder %s35, 1
      %p79 = por %p77, %p78
      %p81 = scmp.ne.s32.totalorder %s66, %s80
      %p82 = scmp.eq.s32.totalorder %s35, 0
      %p83 = por %p81, %p82
      %s85 = sadd.s32 %s84, 1
      %p88 = scmp.eq.s32.totalorder %s29, 1
      %p89 = scmp.ne.s32.totalorder %s84, %s86
      %p90 = scmp.eq.s32.totalorder %s29, 0
      %p91 = por %p89, %p90
      %p92 = scmp.ne.s32.totalorder %s84, %s86
      %p93 = scmp.eq.s32.totalorder %s34, 1
      %p94 = por %p92, %p93
      %p95 = scmp.ne.s32.totalorder %s86, %s87
      %p96 = scmp.eq.s32.totalorder %s34, 0
      %p97 = por %p95, %p96
      %p98 = scmp.ne.s32.totalorder %s86, %s87
      %p99 = scmp.eq.s32.totalorder %s35, 1
      %p100 = por %p98, %p99
      %p102 = scmp.ne.s32.totalorder %s87, %s101
      %p103 = scmp.eq.s32.totalorder %s35, 0
      %p104 = por %p102, %p103
      %s106 = sadd.s32 %s105, 1
      %p109 = scmp.eq.s32.totalorder %s29, 1
      %p110 = scmp.ne.s32.totalorder %s105, %s107
      %p111 = scmp.eq.s32.totalorder %s29, 0
      %p112 = por %p110, %p111
      %p113 = scmp.ne.s32.totalorder %s105, %s107
      %p114 = scmp.eq.s32.totalorder %s34, 1
      %p115 = por %p113, %p114
      %p116 = scmp.ne.s32.totalorder %s107, %s108
      %p117 = scmp.eq.s32.totalorder %s34, 0
      %p118 = por %p116, %p117
      %p119 = scmp.ne.s32.totalorder %s107, %s108
      %p120 = scmp.eq.s32.totalorder %s35, 1
      %p121 = por %p119, %p120
      %p123 = scmp.ne.s32.totalorder %s108, %s122
      %p124 = scmp.eq.s32.totalorder %s35, 0
      %p125 = por %p123, %p124
      %s127 = sadd.s32 %s126, 1
      %p130 = scmp.eq.s32.totalorder %s29, 1
      %p131 = scmp.ne.s32.totalorder %s126, %s128
      %p132 = scmp.eq.s32.totalorder %s29, 0
      %p133 = por %p131, %p132
      %p134 = scmp.ne.s32.totalorder %s126, %s128
      %p135 = scmp.eq.s32.totalorder %s34, 1
      %p136 = por %p134, %p135
      %p137 = scmp.ne.s32.totalorder %s128, %s129
      %p138 = scmp.eq.s32.totalorder %s34, 0
      %p139 = por %p137, %p138
      %p140 = scmp.ne.s32.totalorder %s128, %s129
      %p141 = scmp.eq.s32.totalorder %s35, 1
      %p142 = por %p140, %p141
      %p144 = scmp.ne.s32.totalorder %s129, %s143
      %p145 = scmp.eq.s32.totalorder %s35, 0
      %p146 = por %p144, %p145
      %s147 = ssub.s32 %s29, %s36
      %p148 = scmp.eq.s32.totalorder %s147, 0
      %s150 = sadd.s32 %s149, 1
      %s151 = scalar_select %p148, %s149, %s150
      %p154 = pneg %p148
      %p155 = scmp.eq.s32.totalorder %s29, 1
      %p156 = por %p154, %p155
      %p157 = scmp.ne.s32.totalorder %s149, %s152
      %p158 = scmp.eq.s32.totalorder %s29, 0
      %p159 = por %p157, %p158
      %p160 = scmp.ne.s32.totalorder %s149, %s152
      %p161 = scmp.eq.s32.totalorder %s34, 1
      %p162 = por %p160, %p161
      %p163 = scmp.ne.s32.totalorder %s152, %s153
      %p164 = scmp.eq.s32.totalorder %s34, 0
      %p165 = por %p163, %p164
      %p166 = scmp.ne.s32.totalorder %s152, %s153
      %p167 = scmp.eq.s32.totalorder %s35, 1
      %p168 = por %p166, %p167
      %p170 = scmp.ne.s32.totalorder %s153, %s169
      %p171 = scmp.eq.s32.totalorder %s35, 0
      %p172 = por %p170, %p171
      %s173 = ssub.s32 %s29, %s36
      %p174 = scmp.eq.s32.totalorder %s173, 0
      %s176 = sadd.s32 %s175, 1
      %s177 = scalar_select %p174, %s175, %s176
      %p180 = pneg %p174
      %p181 = scmp.eq.s32.totalorder %s29, 1
      %p182 = por %p180, %p181
      %p183 = scmp.ne.s32.totalorder %s175, %s178
      %p184 = scmp.eq.s32.totalorder %s29, 0
      %p185 = por %p183, %p184
      %p186 = scmp.ne.s32.totalorder %s175, %s178
      %p187 = scmp.eq.s32.totalorder %s34, 1
      %p188 = por %p186, %p187
      %p189 = scmp.ne.s32.totalorder %s178, %s179
      %p190 = scmp.eq.s32.totalorder %s34, 0
      %p191 = por %p189, %p190
      %p192 = scmp.ne.s32.totalorder %s178, %s179
      %p193 = scmp.eq.s32.totalorder %s35, 1
      %p194 = por %p192, %p193
      %p196 = scmp.ne.s32.totalorder %s179, %s195
      %p197 = scmp.eq.s32.totalorder %s35, 0
      %p198 = por %p196, %p197
      %p199 = scmp.le.s32.totalorder 1, %s29
      %p200 = scmp.lt.s32.totalorder %s29, 3
      %p201 = pnand %p199, %p200
      %p202 = pneg %p201
      // Predicated region
      $region9: #{tpu_custom_call.1} parent=5 // pred_check
        _
      $region10: #{tpu_custom_call.1} parent=5 // pred_check_branch
        %204 = sbr.rel (%p201) target = $region12
      $region11: #{tpu_custom_call.1} parent=5 // pred_region
        %s205 = ssub.s32 %s29, 1
        // Predicated region
        $region13: #{tpu_custom_call.1} parent=11 // pred_check
          %p206 = pneg %p76
        $region14: #{tpu_custom_call.1} parent=11 // pred_check_branch
          %208 = sbr.rel (%p206) target = $region16
        $region15: #{tpu_custom_call.1} parent=11 // pred_region
          _
        $region16: #{tpu_custom_call.1} parent=11 // pred_fallthru
          _
        // Predicated region
        $region17: #{tpu_custom_call.1} parent=11 // pred_check
          %p209 = pneg %p97
        $region18: #{tpu_custom_call.1} parent=11 // pred_check_branch
          %211 = sbr.rel (%p209) target = $region20
        $region19: #{tpu_custom_call.1} parent=11 // pred_region
          _
        $region20: #{tpu_custom_call.1} parent=11 // pred_fallthru
          _
        // Predicated region
        $region21: #{tpu_custom_call.1} parent=11 // pred_check
          %p212 = pneg %p118
        $region22: #{tpu_custom_call.1} parent=11 // pred_check_branch
          %214 = sbr.rel (%p212) target = $region24
        $region23: #{tpu_custom_call.1} parent=11 // pred_region
          _
        $region24: #{tpu_custom_call.1} parent=11 // pred_fallthru
          _
        // Predicated region
        $region25: #{tpu_custom_call.1} parent=11 // pred_check
          %p215 = pneg %p139
        $region26: #{tpu_custom_call.1} parent=11 // pred_check_branch
          %217 = sbr.rel (%p215) target = $region28
        $region27: #{tpu_custom_call.1} parent=11 // pred_region
          _
        $region28: #{tpu_custom_call.1} parent=11 // pred_fallthru
          _
      $region12: #{tpu_custom_call.1} parent=5 // pred_fallthru
        _
      %p218 = scmp.lt.s32.totalorder %s29, 2
      // Predicated region
      $region29: #{tpu_custom_call.1} parent=5 // pred_check
        %p219 = pneg %p218
      $region30: #{tpu_custom_call.1} parent=5 // pred_check_branch
        %221 = sbr.rel (%p219) target = $region32
      $region31: #{tpu_custom_call.1} parent=5 // pred_region
        // Predicated region
        $region33: #{tpu_custom_call.1} parent=31 // pred_check
          %p222 = pneg %p49
        $region34: #{tpu_custom_call.1} parent=31 // pred_check_branch
          %224 = sbr.rel (%p222) target = $region36
        $region35: #{tpu_custom_call.1} parent=31 // pred_region
          %s225 = smul.u32 2, %s29
          %p226 = scmp.lt.s32.totalorder %s225, 3
          %s227 = scalar_select %p226, %s225, 3
          %s228 = smul.addr %s227, 8
          %s229 = scalar_lea.vmem %s1, %s228
          %s230 = smul.u32 2, %s29
        $region36: #{tpu_custom_call.1} parent=31 // pred_fallthru
          _
      $region32: #{tpu_custom_call.1} parent=5 // pred_fallthru
        _
      %p231 = scmp.le.s32.totalorder 1, %s29
      %p232 = scmp.lt.s32.totalorder %s29, 3
      %p233 = pnand %p231, %p232
      %p234 = pneg %p233
      // Predicated region
      $region37: #{tpu_custom_call.1} parent=5 // pred_check
        _
      $region38: #{tpu_custom_call.1} parent=5 // pred_check_branch
        %236 = sbr.rel (%p233) target = $region40
      $region39: #{tpu_custom_call.1} parent=5 // pred_region
        %s237 = ssub.s32 %s29, 1
        %s238 = smul.u32 2, %s34
        %p239 = scmp.lt.s32.totalorder %s238, 3
        %s240 = scalar_select %p239, %s238, 3
        %s241 = smul.addr %s240, 8
        %s242 = scalar_lea.vmem %s1, %s241
        %p243 = pneg %p55
        %p244 = pneg %p52
        %p245 = pneg %p76
        %p246 = pneg %p73
        %p247 = pneg %p97
        %p248 = pneg %p94
        %p249 = pneg %p118
        %p250 = pneg %p115
        %p251 = pneg %p139
        %p252 = pneg %p136
        %p253 = pneg %p165
        %p254 = pneg %p162
        %s255 = sand.u32 %s152, 1
        %s256 = scalar_lea.sflag [#allocation7], %s255
        %s257 = sand.u32 %s152, 1
        %s258 = smul.addr %s257, 16
        %s259 = scalar_lea.vmem [#allocation6], %s258
        %p260 = pneg %p191
        %p261 = pneg %p188
        %s262 = sand.u32 %s178, 1
        %s263 = scalar_lea.sflag [#allocation9], %s262
        %s264 = sand.u32 %s178, 1
        %s265 = smul.addr %s264, 16
        %s266 = scalar_lea.vmem [#allocation8], %s265
        %s267 = smul.u32 2, %s34
        %p268 = scmp.lt.s32.totalorder %s267, 3
        %s269 = scalar_select %p268, %s267, 3
        %s270 = smul.addr %s269, 8
        %s271 = scalar_lea.vmem %s1, %s270
        %s272 = smul.u32 2, %s34
        %s273 = smul.u32 2, %s34
        %s274 = smul.u32 2, %s34
        %s275 = smul.u32 %s34, 16
        %s276 = sld [smem:[#allocation5 + %s275]]
        %s277 = scalar_lea.hbm %s2, %s276
        // Predicated region
        $region41: #{tpu_custom_call.1} parent=39 // pred_check
          _
        $region42: #{tpu_custom_call.1} parent=39 // pred_check_branch
          %279 = sbr.rel target = $region44
        $region43: #{tpu_custom_call.1} parent=39 // pred_region
          %280 = sst [smem:[#allocation12]] [#allocation11]
          %281 = sst [smem:[#allocation13]] [#allocation10]
        $region44: #{tpu_custom_call.1} parent=39 // pred_fallthru
          _
        %283 = shalt.err (0)
        %s285 = sshll.u32 %s277, 4
        %s286 = int_to_ptr.hbm [resolvable:$true] %s285
        %s287 = sshll.u32 [#allocation2], 4
        %s288 = int_to_ptr.vmem [resolvable:$true] %s287
        %290 = dma.hbm_to_vmem [thread:$0]  %s286, 16, %s288, [#allocation3]
        %s291 = sadd.s32 %s275, 1
        %s292 = sld [smem:[#allocation5 + %s291]]
        %s293 = scalar_lea.hbm %s2, %s292
        %s294 = scalar_lea.vmem [#allocation2], 1
        %s295 = scalar_lea.sflag [#allocation3], 1
        // Predicated region
        $region45: #{tpu_custom_call.1} parent=39 // pred_check
          _
        $region46: #{tpu_custom_call.1} parent=39 // pred_check_branch
          %297 = sbr.rel target = $region48
        $region47: #{tpu_custom_call.1} parent=39 // pred_region
          %298 = sst [smem:[#allocation12]] [#allocation15]
          %299 = sst [smem:[#allocation13]] [#allocation14]
        $region48: #{tpu_custom_call.1} parent=39 // pred_fallthru
          _
        %301 = shalt.err (0)
        %s303 = sshll.u32 %s293, 4
        %s304 = int_to_ptr.hbm [resolvable:$true] %s303
        %s305 = sshll.u32 %s294, 4
        %s306 = int_to_ptr.vmem [resolvable:$true] %s305
        %308 = dma.hbm_to_vmem [thread:$0]  %s304, 16, %s306, %s295
        %s309 = sadd.s32 %s275, 2
        %s310 = sld [smem:[#allocation5 + %s309]]
        %s311 = scalar_lea.hbm %s2, %s310
        %s312 = scalar_lea.vmem [#allocation2], 2
        %s313 = scalar_lea.sflag [#allocation3], 2
        // Predicated region
        $region49: #{tpu_custom_call.1} parent=39 // pred_check
          _
        $region50: #{tpu_custom_call.1} parent=39 // pred_check_branch
          %315 = sbr.rel target = $region52
        $region51: #{tpu_custom_call.1} parent=39 // pred_region
          %316 = sst [smem:[#allocation12]] [#allocation17]
          %317 = sst [smem:[#allocation13]] [#allocation16]
        $region52: #{tpu_custom_call.1} parent=39 // pred_fallthru
          _
        %319 = shalt.err (0)
        %s321 = sshll.u32 %s311, 4
        %s322 = int_to_ptr.hbm [resolvable:$true] %s321
        %s323 = sshll.u32 %s312, 4
        %s324 = int_to_ptr.vmem [resolvable:$true] %s323
        %326 = dma.hbm_to_vmem [thread:$0]  %s322, 16, %s324, %s313
        %s327 = sadd.s32 %s275, 3
        %s328 = sld [smem:[#allocation5 + %s327]]
        %s329 = scalar_lea.hbm %s2, %s328
        %s330 = scalar_lea.vmem [#allocation2], 3
        %s331 = scalar_lea.sflag [#allocation3], 3
        // Predicated region
        $region53: #{tpu_custom_call.1} parent=39 // pred_check
          _
        $region54: #{tpu_custom_call.1} parent=39 // pred_check_branch
          %333 = sbr.rel target = $region56
        $region55: #{tpu_custom_call.1} parent=39 // pred_region
          %334 = sst [smem:[#allocation12]] [#allocation19]
          %335 = sst [smem:[#allocation13]] [#allocation18]
        $region56: #{tpu_custom_call.1} parent=39 // pred_fallthru
          _
        %337 = shalt.err (0)
        %s339 = sshll.u32 %s329, 4
        %s340 = int_to_ptr.hbm [resolvable:$true] %s339
        %s341 = sshll.u32 %s330, 4
        %s342 = int_to_ptr.vmem [resolvable:$true] %s341
        %344 = dma.hbm_to_vmem [thread:$0]  %s340, 16, %s342, %s331
        %s345 = sadd.s32 %s275, 4
        %s346 = sld [smem:[#allocation5 + %s345]]
        %s347 = scalar_lea.hbm %s2, %s346
        %s348 = scalar_lea.vmem [#allocation2], 4
        %s349 = scalar_lea.sflag [#allocation3], 4
        // Predicated region
        $region57: #{tpu_custom_call.1} parent=39 // pred_check
          _
        $region58: #{tpu_custom_call.1} parent=39 // pred_check_branch
          %351 = sbr.rel target = $region60
        $region59: #{tpu_custom_call.1} parent=39 // pred_region
          %352 = sst [smem:[#allocation12]] [#allocation21]
          %353 = sst [smem:[#allocation13]] [#allocation20]
        $region60: #{tpu_custom_call.1} parent=39 // pred_fallthru
          _
        %355 = shalt.err (0)
        %s357 = sshll.u32 %s347, 4
        %s358 = int_to_ptr.hbm [resolvable:$true] %s357
        %s359 = sshll.u32 %s348, 4
        %s360 = int_to_ptr.vmem [resolvable:$true] %s359
        %362 = dma.hbm_to_vmem [thread:$0]  %s358, 16, %s360, %s349
        %s363 = sadd.s32 %s275, 5
        %s364 = sld [smem:[#allocation5 + %s363]]
        %s365 = scalar_lea.hbm %s2, %s364
        %s366 = scalar_lea.vmem [#allocation2], 5
        %s367 = scalar_lea.sflag [#allocation3], 5
        // Predicated region
        $region61: #{tpu_custom_call.1} parent=39 // pred_check
          _
        $region62: #{tpu_custom_call.1} parent=39 // pred_check_branch
          %369 = sbr.rel target = $region64
        $region63: #{tpu_custom_call.1} parent=39 // pred_region
          %370 = sst [smem:[#allocation12]] [#allocation23]
          %371 = sst [smem:[#allocation13]] [#allocation22]
        $region64: #{tpu_custom_call.1} parent=39 // pred_fallthru
          _
        %373 = shalt.err (0)
        %s375 = sshll.u32 %s365, 4
        %s376 = int_to_ptr.hbm [resolvable:$true] %s375
        %s377 = sshll.u32 %s366, 4
        %s378 = int_to_ptr.vmem [resolvable:$true] %s377
        %380 = dma.hbm_to_vmem [thread:$0]  %s376, 16, %s378, %s367
        %s381 = sadd.s32 %s275, 6
        %s382 = sld [smem:[#allocation5 + %s381]]
        %s383 = scalar_lea.hbm %s2, %s382
        %s384 = scalar_lea.vmem [#allocation2], 6
        %s385 = scalar_lea.sflag [#allocation3], 6
        // Predicated region
        $region65: #{tpu_custom_call.1} parent=39 // pred_check
          _
        $region66: #{tpu_custom_call.1} parent=39 // pred_check_branch
          %387 = sbr.rel target = $region68
        $region67: #{tpu_custom_call.1} parent=39 // pred_region
          %388 = sst [smem:[#allocation12]] [#allocation25]
          %389 = sst [smem:[#allocation13]] [#allocation24]
        $region68: #{tpu_custom_call.1} parent=39 // pred_fallthru
          _
        %391 = shalt.err (0)
        %s393 = sshll.u32 %s383, 4
        %s394 = int_to_ptr.hbm [resolvable:$true] %s393
        %s395 = sshll.u32 %s384, 4
        %s396 = int_to_ptr.vmem [resolvable:$true] %s395
        %398 = dma.hbm_to_vmem [thread:$0]  %s394, 16, %s396, %s385
        %s399 = sadd.s32 %s275, 7
        %s400 = sld [smem:[#allocation5 + %s399]]
        %s401 = scalar_lea.hbm %s2, %s400
        %s402 = scalar_lea.vmem [#allocation2], 7
        %s403 = scalar_lea.sflag [#allocation3], 7
        // Predicated region
        $region69: #{tpu_custom_call.1} parent=39 // pred_check
          _
        $region70: #{tpu_custom_call.1} parent=39 // pred_check_branch
          %405 = sbr.rel target = $region72
        $region71: #{tpu_custom_call.1} parent=39 // pred_region
          %406 = sst [smem:[#allocation12]] [#allocation27]
          %407 = sst [smem:[#allocation13]] [#allocation26]
        $region72: #{tpu_custom_call.1} parent=39 // pred_fallthru
          _
        %409 = shalt.err (0)
        %s411 = sshll.u32 %s401, 4
        %s412 = int_to_ptr.hbm [resolvable:$true] %s411
        %s413 = sshll.u32 %s402, 4
        %s414 = int_to_ptr.vmem [resolvable:$true] %s413
        %416 = dma.hbm_to_vmem [thread:$0]  %s412, 16, %s414, %s403
        loop: start=0, step=1, limit=16
        $region73: #{tpu_custom_call.1} parent=39 // loop_pre_header
          _
        $region74: #{tpu_custom_call.1} parent=39 // loop_header
          %s418 = sphi 0, %s422
          %p419 = scmp.ge.s32.totalorder %s418, 16
        $region75: #{tpu_custom_call.1} parent=39 // loop_header_branch
          %421 = sbr.rel (%p419) target = $region79
        $region76: #{tpu_custom_call.1} parent=39 // loop_body
          %p423 = scmp.lt.s32.totalorder %s418, 0
          %s424 = ssub.s32 0, %s418
          %s425 = scalar_select %p423, %s424, %s418
          %s426 = sand.u32 %s425, 7
          %s427 = ssub.s32 0, %s426
          %s428 = scalar_select %p423, %s427, %s426
          %p429 = scmp.ne.s32.totalorder %s428, 0
          %p430 = scmp.lt.s32.totalorder %s428, 0
          %p431 = pnand %p430, %p429
          %p432 = pneg %p431
          %s433 = sadd.s32 %s428, 8
          %s434 = scalar_select %p432, %s433, %s428
          %s435 = scalar_lea.sflag [#allocation3], %s434
          %437 = dma.done %s435, 16
          %s438 = sadd.s32 %s418, 8
          %p439 = scmp.lt.s32.totalorder %s438, 16
          // Predicated region
          $region80: #{tpu_custom_call.1} parent=76 // pred_check
            %p440 = pneg %p439
          $region81: #{tpu_custom_call.1} parent=76 // pred_check_branch
            %442 = sbr.rel (%p440) target = $region83
          $region82: #{tpu_custom_call.1} parent=76 // pred_region
            %s443 = sadd.s32 %s275, %s438
            %s444 = sld [smem:[#allocation5 + %s443]]
            %p445 = scmp.lt.s32.totalorder %s438, 0
            %s446 = ssub.s32 0, %s438
            %s447 = scalar_select %p445, %s446, %s438
            %s448 = sand.u32 %s447, 7
            %s449 = ssub.s32 0, %s448
            %s450 = scalar_select %p445, %s449, %s448
            %p451 = scmp.ne.s32.totalorder %s450, 0
            %p452 = scmp.lt.s32.totalorder %s450, 0
            %p453 = pnand %p452, %p451
            %p454 = pneg %p453
            %s455 = sadd.s32 %s450, 8
            %s456 = scalar_select %p454, %s455, %s450
            %s457 = scalar_lea.hbm %s2, %s444
            %s458 = scalar_lea.vmem [#allocation2], %s438
            %s459 = scalar_lea.sflag [#allocation3], %s456
            // Predicated region
            $region84: #{tpu_custom_call.1} parent=82 // pred_check
              _
            $region85: #{tpu_custom_call.1} parent=82 // pred_check_branch
              %461 = sbr.rel target = $region87
            $region86: #{tpu_custom_call.1} parent=82 // pred_region
              %462 = sst [smem:[#allocation12]] [#allocation29]
              %463 = sst [smem:[#allocation13]] [#allocation28]
            $region87: #{tpu_custom_call.1} parent=82 // pred_fallthru
              _
            %465 = shalt.err (0)
            %s467 = sshll.u32 %s457, 4
            %s468 = int_to_ptr.hbm [resolvable:$true] %s467
            %s469 = sshll.u32 %s458, 4
            %s470 = int_to_ptr.vmem [resolvable:$true] %s469
            %472 = dma.hbm_to_vmem [thread:$0]  %s468, 16, %s470, %s459
          $region83: #{tpu_custom_call.1} parent=76 // pred_fallthru
            _
        $region77: #{tpu_custom_call.1} parent=39 // loop_footer
          %s422 = sadd.s32 1, %s418
        $region78: #{tpu_custom_call.1} parent=39 // loop_footer_branch
          %417 = sbr.rel target = $region74
        $region79: #{tpu_custom_call.1} parent=39 // loop_exit
          _
        %v473 = vld [vmem:[#allocation2] sm:$0xff]
        %v474 = vld [vmem:[#allocation2 + $0x8] sm:$0xff]
        %v475 = vld [vmem:[%s271] sm:$0xff]
        %v476 = vld [vmem:[%s271 + $0x8] sm:$0xff]
        %v477 = vld [vmem:[%s4] sm:$0x1]
        %vm478 = vcmp.eq.s32.totalorder %v475, 1
        %vm479 = vcmp.eq.s32.totalorder %v476, 1
        %v480 = vld [vmem:[%s4 + $0x1] sm:$0x1]
        %v481 = vsel %vm478, 1, 0
        %v482 = vsel %vm479, 1, 0
        %483 = vset.pattern.permute.xlu0 0
        %484 = vperm.xlu0 %483, %v481
        %v485 = vpop.permute.xlu0 %484
        %486 = vset.pattern.permute.xlu0 0
        %487 = vperm.xlu0 %486, %v482
        %v488 = vpop.permute.xlu0 %487
        %vm489 = vcmp.eq.s32.totalorder %v485, 1
        %vm490 = vcmp.eq.s32.totalorder %v488, 1
        %v491 = vperm.slane %v480, 0
        %v492 = vperm.slane %v477, 0
        %v493 = vsel %vm489, %v491, %v492
        %v494 = vsel %vm490, %v491, %v492
        %v495 = vadd.f32 %v473, %v493
        %v496 = vadd.f32 %v474, %v494
        %v497 = vld [vmem:[%s3] sm:$0xff]
        %v498 = vld [vmem:[%s3 + $0x8] sm:$0xff]
        %v499 = vadd.f32 %v495, %v497
        %v500 = vadd.f32 %v496, %v498
        %501 = vadd.xlane.f32.xlu0 %v499
        %v502 = vpop.xlane.xlu0 %501
        %503 = vadd.xlane.f32.xlu0 %v500
        %v504 = vpop.xlane.xlu0 %503
        %v505 = vrcp.pop 128.0
        %v506 = vmul.f32 128.0, %v505
        %v507 = vsub.f32 1.0, %v506
        %v508 = vmul.f32 %v505, %v507
        %v509 = vadd.f32 %v505, %v508
        %vm510 = vweird.f32 %v505
        %v511 = vsel %vm510, %v505, %v509
        %v512 = vmul.f32 %v502, %v511
        %v513 = vmul.f32 %v504, %v511
        %v514 = vsub.f32 %v499, %v512
        %v515 = vsub.f32 %v500, %v513
        %v516 = vmul.f32 %v514, %v514
        %v517 = vmul.f32 %v515, %v515
        %518 = vadd.xlane.f32.xlu0 %v516
        %v519 = vpop.xlane.xlu0 %518
        %520 = vadd.xlane.f32.xlu0 %v517
        %v521 = vpop.xlane.xlu0 %520
        %v522 = vmul.f32 %v519, %v511
        %v523 = vmul.f32 %v521, %v511
        %v524 = vadd.f32 %v522, 1e-12
        %v525 = vadd.f32 %v523, 1e-12
        %v526 = vrsqrt.pop %v524
        %v527 = vmul.f32 %v526, %v524
        %v528 = vmul.f32 %v527, %v526
        %v529 = vmul.f32 0.5, %v528
        %v530 = vsub.f32 1.5, %v529
        %v531 = vmul.f32 %v526, %v530
        %vm532 = vweird.f32 %v524
        %vm533 = vweird.f32 %v526
        %vm534 = vmor %vm532, %vm533
        %v535 = vsel %vm534, %v526, %v531
        %v536 = vrsqrt.pop %v525
        %v537 = vmul.f32 %v536, %v525
        %v538 = vmul.f32 %v537, %v536
        %v539 = vmul.f32 0.5, %v538
        %v540 = vsub.f32 1.5, %v539
        %v541 = vmul.f32 %v536, %v540
        %vm542 = vweird.f32 %v525
        %vm543 = vweird.f32 %v536
        %vm544 = vmor %vm542, %vm543
        %v545 = vsel %vm544, %v536, %v541
        %v546 = vmul.f32 %v514, %v535
        %v547 = vmul.f32 %v515, %v545
        %v548 = vld [vmem:[%s5] sm:$0x1]
        %v550 = vperm.slane %v548, 0
        %v552 = vmul.f32 %v546, %v550
        %v553 = vmul.f32 %v547, %v550
        %v554 = vld [vmem:[%s6] sm:$0x1]
        %v556 = vperm.slane %v554, 0
        %v558 = vadd.f32 %v552, %v556
        %v559 = vadd.f32 %v553, %v556
        %560 = vst [vmem:[%s259] sm:$0xff] %v558
        %561 = vst [vmem:[%s259 + $0x8] sm:$0xff] %v559
        %562 = vst [vmem:[%s266] sm:$0xff] %v473
        %563 = vst [vmem:[%s266 + $0x8] sm:$0xff] %v474
        %s564 = sand.u32 %s152, 1
        %s565 = scalar_lea.sflag [#allocation7], %s564
        %s566 = sand.u32 %s152, 1
        %s567 = smul.addr %s566, 16
        %s568 = scalar_lea.vmem [#allocation6], %s567
        %s569 = sand.u32 %s178, 1
        %s570 = scalar_lea.sflag [#allocation9], %s569
        %s571 = sand.u32 %s178, 1
        %s572 = smul.addr %s571, 16
        %s573 = scalar_lea.vmem [#allocation8], %s572
        // Predicated region
        $region88: #{tpu_custom_call.1} parent=39 // pred_check
          %p574 = pneg %p162
        $region89: #{tpu_custom_call.1} parent=39 // pred_check_branch
          %576 = sbr.rel (%p574) target = $region91
        $region90: #{tpu_custom_call.1} parent=39 // pred_region
          %s577 = smul.u32 2, %s34
          %579 = vsyncadd %s565, 0
          %s580 = smul.addr %s577, 8
          %s581 = scalar_lea.hbm %s7, %s580
          %s582 = sshll.u32 %s568, 4
          %s583 = int_to_ptr.vmem [resolvable:$true] %s582
          %s584 = sshll.u32 %s581, 4
          %s585 = int_to_ptr.hbm [resolvable:$true] %s584
          %590 = dma.vmem_to_hbm [thread:$0]  %s583, 256, %s585, %s565, 128, 128, 8
        $region91: #{tpu_custom_call.1} parent=39 // pred_fallthru
          _
        // Predicated region
        $region92: #{tpu_custom_call.1} parent=39 // pred_check
          %p591 = pneg %p188
        $region93: #{tpu_custom_call.1} parent=39 // pred_check_branch
          %593 = sbr.rel (%p591) target = $region95
        $region94: #{tpu_custom_call.1} parent=39 // pred_region
          %s594 = smul.u32 2, %s34
          %596 = vsyncadd %s570, 0
          %s597 = smul.addr %s594, 8
          %s598 = scalar_lea.hbm %s8, %s597
          %s599 = sshll.u32 %s573, 4
          %s600 = int_to_ptr.vmem [resolvable:$true] %s599
          %s601 = sshll.u32 %s598, 4
          %s602 = int_to_ptr.hbm [resolvable:$true] %s601
          %607 = dma.vmem_to_hbm [thread:$0]  %s600, 256, %s602, %s570, 128, 128, 8
        $region95: #{tpu_custom_call.1} parent=39 // pred_fallthru
          _
      $region40: #{tpu_custom_call.1} parent=5 // pred_fallthru
        _
      %p608 = scmp.le.s32.totalorder 2, %s29
      // Predicated region
      $region96: #{tpu_custom_call.1} parent=5 // pred_check
        %p609 = pneg %p608
      $region97: #{tpu_custom_call.1} parent=5 // pred_check_branch
        %611 = sbr.rel (%p609) target = $region99
      $region98: #{tpu_custom_call.1} parent=5 // pred_region
        %s612 = ssub.s32 %s29, 2
        // Predicated region
        $region100: #{tpu_custom_call.1} parent=98 // pred_check
          %p613 = pneg %p168
        $region101: #{tpu_custom_call.1} parent=98 // pred_check_branch
          %615 = sbr.rel (%p613) target = $region103
        $region102: #{tpu_custom_call.1} parent=98 // pred_region
          %s616 = sand.u32 %s153, 1
          %s617 = scalar_lea.sflag [#allocation7], %s616
          %s618 = sand.u32 %s153, 1
          %s619 = smul.addr %s618, 16
          %s620 = scalar_lea.vmem [#allocation6], %s619
          %622 = dma.done %s617, 256
        $region103: #{tpu_custom_call.1} parent=98 // pred_fallthru
          _
        // Predicated region
        $region104: #{tpu_custom_call.1} parent=98 // pred_check
          %p623 = pneg %p194
        $region105: #{tpu_custom_call.1} parent=98 // pred_check_branch
          %625 = sbr.rel (%p623) target = $region107
        $region106: #{tpu_custom_call.1} parent=98 // pred_region
          %s626 = sand.u32 %s179, 1
          %s627 = scalar_lea.sflag [#allocation9], %s626
          %s628 = sand.u32 %s179, 1
          %s629 = smul.addr %s628, 16
          %s630 = scalar_lea.vmem [#allocation8], %s629
          %632 = dma.done %s627, 256
        $region107: #{tpu_custom_call.1} parent=98 // pred_fallthru
          _
      $region99: #{tpu_custom_call.1} parent=5 // pred_fallthru
        _
    $region6: #{tpu_custom_call.1} parent=1 // loop_footer
      %s33 = sadd.s32 1, %s29
    $region7: #{tpu_custom_call.1} parent=1 // loop_footer_branch
      %28 = sbr.rel target = $region3
    $region8: #{tpu_custom_call.1} parent=1 // loop_exit
      _
    %633 = vsyncpa [#allocation7], 1
    %s634 = scalar_lea.sflag [#allocation7], 1
    %635 = vsyncpa %s634, 1
    %636 = vsyncpa [#allocation9], 1
    %s637 = scalar_lea.sflag [#allocation9], 1
    %638 = vsyncpa %s637, 1
  %639 = vsyncmov [#allocation3]
  %s640 = vpop.sfrf %639
  %p641 = scmp.eq.s32.totalorder %s640, 0
  %p642 = pneg %p641
  %644 = shalt.err (%p642)
  %s645 = scalar_lea.sflag [#allocation3], 1
  %646 = vsyncmov %s645
  %s647 = vpop.sfrf %646
  %p648 = scmp.eq.s32.totalorder %s647, 0
  %p649 = pneg %p648
  %651 = shalt.err (%p649)
  %s652 = scalar_lea.sflag [#allocation3], 2
  %653 = vsyncmov %s652
  %s654 = vpop.sfrf %653
  %p655 = scmp.eq.s32.totalorder %s654, 0
  %p656 = pneg %p655
  %658 = shalt.err (%p656)
  %s659 = scalar_lea.sflag [#allocation3], 3
  %660 = vsyncmov %s659
  %s661 = vpop.sfrf %660
  %p662 = scmp.eq.s32.totalorder %s661, 0
  %p663 = pneg %p662
  %665 = shalt.err (%p663)
  %s666 = scalar_lea.sflag [#allocation3], 4
  %667 = vsyncmov %s666
  %s668 = vpop.sfrf %667
  %p669 = scmp.eq.s32.totalorder %s668, 0
  %p670 = pneg %p669
  %672 = shalt.err (%p670)
  %s673 = scalar_lea.sflag [#allocation3], 5
  %674 = vsyncmov %s673
  %s675 = vpop.sfrf %674
  %p676 = scmp.eq.s32.totalorder %s675, 0
  %p677 = pneg %p676
  %679 = shalt.err (%p677)
  %s680 = scalar_lea.sflag [#allocation3], 6
  %681 = vsyncmov %s680
  %s682 = vpop.sfrf %681
  %p683 = scmp.eq.s32.totalorder %s682, 0
  %p684 = pneg %p683
  %686 = shalt.err (%p684)
  %s687 = scalar_lea.sflag [#allocation3], 7
  %688 = vsyncmov %s687
  %s689 = vpop.sfrf %688
  %p690 = scmp.eq.s32.totalorder %s689, 0
  %p691 = pneg %p690
  %693 = shalt.err (%p691)

</llo_original>
